<compile_context>
chip_gen: v7x
topology: tpu7x:2x2x1
jax: 0.10.0
libtpu: 0.0.40
codegen_flags: <defaults>
</compile_context>

<pallas_src>
import math
from functools import partial

import jax
import jax.numpy as jnp
from jax.experimental import pallas as pl
from jax.experimental.pallas import tpu as pltpu

_CLAMP_LO = math.log10(1.0 + 0.1 / 140.0)


def _vmem_capacity_bytes():
    """Best-effort physical VMEM query; falls back to the v7x 64 MiB floor."""
    try:
        info = pltpu.get_tpu_info()
        for attr in ("vmem_capacity_bytes", "vmem_bytes"):
            v = getattr(info, attr, None)
            if v:
                return int(v)
    except Exception:
        pass
    return 64 << 20


def _generation_budget():
    """Returns (per-input-block element budget, scoped vmem_limit_bytes).

    v5e/v6e (128 MiB physical VMEM): 1M-elem (4 MiB f32) input blocks and a
    64 MiB scoped limit -> bigger tiles amortize the ~0.35 us per-step cost.
    v7x / unknown (64 MiB physical VMEM): hold at 512K elems / 32 MiB so the
    2x double-buffered inputs plus whole-tile f32 temporaries stay inside VMEM.
    """
    if _vmem_capacity_bytes() >= (128 << 20):
        return 1 * 1024 * 1024, 64 * 1024 * 1024
    return 512 * 1024, 32 * 1024 * 1024


def _pick_block_rows(n, budget_elems):
    """Pick row-block size: multiple of 8, fits the VMEM budget, >= 4 blocks."""
    if n <= 8:
        return n  # tiny input: single full block
    cap = min(budget_elems // n, pl.cdiv(n, 4))   # budget + >=4 blocks
    cap = max(8, (cap // 8) * 8)
    for tm in range(cap, 7, -8):                  # prefer a divisor (no tail mask)
        if n % tm == 0:
            return tm
    return cap                                    # tail block handled via masking
    # TODO(synk): for N large enough that an (8, N) f32 block exceeds the VMEM
    # budget (N >> 64K), switch to fixed-size 2-D tiling of the inner axis.


def _weight_mse_kernel(yt_ref, yp_ref, cn_ref, r_ref, *, block_rows, n_rows,
                       needs_mask):
    # One row block of the inputs: (TM, N). Cast per-tile so HBM traffic stays
    # at the caller's dtype width.
    yt = yt_ref[...].astype(jnp.float32)
    yp = yp_ref[...].astype(jnp.float32)

    # mask = where(y_true == 0, 0, 1); y_pred *= mask  -> folded into one where
    # (saves a 0/1 materialization and a vmul per element; matters on v7x).
    diff = jnp.where(yt == 0.0, 0.0, yp) - yt
    sq = diff * diff

    # weights = clamp(y_true, log10(1 + 0.1/140), 1)
    weights = jnp.clip(yt, _CLAMP_LO, 1.0)

    # num contribution: per-column counts of y_true > 0 (exact small ints).
    pos = yt > 0.0

    if needs_mask:  # static: only emitted when block_rows does not divide N
        row = (pl.program_id(0) * block_rows
               + jax.lax.broadcasted_iota(jnp.int32, (block_rows, 1), 0))
        valid = row < n_rows
        weights = jnp.where(valid, weights, 0.0)
        sq = jnp.where(valid, sq, 0.0)
        pos = jnp.logical_and(pos, valid)

    # sum(W @ S) == dot(colsum(W), rowsum(S)) -> emit per-block partials only.
    cn_ref[0:1, 0:1, :] = jnp.sum(weights, axis=0)[None, None, :]
    cn_ref[0:1, 1:2, :] = (
        jnp.sum(pos, axis=0).astype(jnp.float32)[None, None, :])
    r_ref[...] = jnp.sum(sq, axis=1)[None, None, :]


def weight_mse(y_true, y_pred, *, block_rows=None):
    assert y_true.shape == y_pred.shape
    assert y_true.ndim == 2 and y_true.shape[0] == y_true.shape[1], (
        "torch.matmul(weights, sq) with same-shaped operands requires square inputs"
    )
    n = y_true.shape[0]

    budget_elems, vmem_limit = _generation_budget()
    tm = block_rows if block_rows is not None else _pick_block_rows(n, budget_elems)
    assert tm == n or tm % 8 == 0, "block_rows must be a multiple of 8 (or == N)"
    nblocks = pl.cdiv(n, tm)
    needs_mask = (n % tm) != 0

    itemsize = jnp.dtype(y_true.dtype).itemsize
    cost = pl.CostEstimate(
        flops=10 * n * n,
        transcendentals=0,
        bytes_accessed=2 * n * n * itemsize + nblocks * (2 * n + tm) * 4,
    )

    kernel = partial(_weight_mse_kernel, block_rows=tm, n_rows=n,
                     needs_mask=needs_mask)

    cn_part, r_part = pl.pallas_call(
        kernel,
        grid=(nblocks,),
        in_specs=[
            pl.BlockSpec((tm, n), lambda i: (i, 0)),
            pl.BlockSpec((tm, n), lambda i: (i, 0)),
        ],
        out_specs=[
            pl.BlockSpec((1, 2, n), lambda i: (i, 0, 0)),
            pl.BlockSpec((1, 1, tm), lambda i: (i, 0, 0)),
        ],
        out_shape=[
            jax.ShapeDtypeStruct((nblocks, 2, n), jnp.float32),   # [colsum(W); counts]
            jax.ShapeDtypeStruct((nblocks, 1, tm), jnp.float32),  # rowsum(S) per block
        ],
        compiler_params=pltpu.CompilerParams(
            dimension_semantics=("parallel",),
            vmem_limit_bytes=vmem_limit,
        ),
        cost_estimate=cost,
    )(y_true, y_pred)

    # Tiny epilogue (O(nblocks * N) work): combine partials.
    c = jnp.sum(cn_part[:, 0, :], axis=0)                  # colsum(W), (N,)
    # Exact integer count: per-block/per-column f32 partials are <= tm (exact),
    # combined in int32 so large dense inputs don't lose integer precision.
    num = jnp.sum(jnp.sum(cn_part[:, 1, :].astype(jnp.int32), axis=0))
    r = r_part[:, 0, :].reshape(-1)[:n]                    # rowsum(S), (N,)
    # Matches the reference (up to fp summation order): NaN/Inf if num == 0.
    return jnp.dot(c, r) / num


def _weight_mse_ref(y_true, y_pred):
    # Pure-JAX reference mirroring the PyTorch forward.
    num = jnp.sum((y_true > 0.0).astype(jnp.float32))
    mask = jnp.where(y_true == 0.0, 0.0, 1.0)
    y_pred = y_pred * mask
    weights = jnp.clip(y_true, _CLAMP_LO, 1.0)
    return jnp.sum(weights @ jnp.square(y_pred - y_true)) / num


if __name__ == "__main__":
    key = jax.random.PRNGKey(0)

    # (N, explicit block_rows): auto path (4 blocks), explicit 8-block path,
    # and a non-divisible N exercising the masked tail block.
    for n, brows in ((256, None), (256, 32), (250, None)):
        k1, k2, k3, key = jax.random.split(key, 4)
        # y_true in [0, 1] with ~30% exact zeros (so mask / num are meaningful).
        u = jax.random.uniform(k1, (n, n), dtype=jnp.float32)
        drop = jax.random.uniform(k2, (n, n), dtype=jnp.float32) < 0.3
        y_true = jnp.where(drop, 0.0, u)
        y_pred = jax.random.uniform(k3, (n, n), dtype=jnp.float32)

        out = jax.block_until_ready(weight_mse(y_true, y_pred, block_rows=brows))
        ref = _weight_mse_ref(y_true, y_pred)
        assert jnp.allclose(out, ref, rtol=1e-4, atol=1e-5), (n, brows, out, ref)

    print("KERNEL_OK")
</pallas_src>

<mosaic_0001>
module attributes {stable_mosaic.version = 11 : i64} {
  func.func @_weight_mse_kernel(%arg0: i32, %arg1: memref<64x256xf32, #tpu.memory_space<vmem>>, %arg2: memref<64x256xf32, #tpu.memory_space<vmem>>, %arg3: memref<1x2x256xf32, #tpu.memory_space<vmem>>, %arg4: memref<1x1x64xf32, #tpu.memory_space<vmem>>) attributes {dimension_semantics = [#tpu.dimension_semantics<parallel>], iteration_bounds = array<i64: 4>, scalar_prefetch = 0 : i64, scratch_operands = 0 : i64, tpu.core_type = #tpu.core_type<tc>, window_params = [{transform_indices = @transform_0, window_bounds = array<i64: 64, 256>}, {transform_indices = @transform_1, window_bounds = array<i64: 64, 256>}, {transform_indices = @transform_2, window_bounds = array<i64: 1, 2, 256>}, {transform_indices = @transform_3, window_bounds = array<i64: 1, 1, 64>}]} {
    %c0 = arith.constant 0 : index
    %c0_0 = arith.constant 0 : index
    %0 = vector.load %arg1[%c0, %c0_0] : memref<64x256xf32, #tpu.memory_space<vmem>>, vector<64x256xf32>
    %c0_1 = arith.constant 0 : index
    %c0_2 = arith.constant 0 : index
    %1 = vector.load %arg2[%c0_1, %c0_2] : memref<64x256xf32, #tpu.memory_space<vmem>>, vector<64x256xf32>
    %cst = arith.constant 0.000000e+00 : f32
    %2 = vector.broadcast %cst : f32 to vector<64x256xf32>
    %3 = arith.cmpf oeq, %0, %2 : vector<64x256xf32>
    %cst_3 = arith.constant 0.000000e+00 : f32
    %4 = vector.broadcast %cst_3 : f32 to vector<64x256xf32>
    %5 = arith.select %3, %4, %1 : vector<64x256xi1>, vector<64x256xf32>
    %6 = arith.subf %5, %0 : vector<64x256xf32>
    %7 = arith.mulf %6, %6 : vector<64x256xf32>
    %cst_4 = arith.constant 3.10099596E-4 : f32
    %cst_5 = arith.constant 1.000000e+00 : f32
    %8 = vector.broadcast %cst_4 : f32 to vector<64x256xf32>
    %9 = arith.maximumf %8, %0 : vector<64x256xf32>
    %10 = vector.broadcast %cst_5 : f32 to vector<64x256xf32>
    %11 = arith.minimumf %10, %9 : vector<64x256xf32>
    %cst_6 = arith.constant 0.000000e+00 : f32
    %12 = vector.broadcast %cst_6 : f32 to vector<64x256xf32>
    %13 = arith.cmpf ogt, %0, %12 : vector<64x256xf32>
    %cst_7 = arith.constant dense<0.000000e+00> : vector<256xf32>
    %14 = vector.multi_reduction <add>, %11, %cst_7 [0] : vector<64x256xf32> to vector<256xf32>
    %15 = vector.shape_cast %14 : vector<256xf32> to vector<1x1x256xf32>
    %c0_8 = arith.constant 0 : index
    %c0_9 = arith.constant 0 : index
    %c0_10 = arith.constant 0 : index
    %16 = vector.load %arg3[%c0_8, %c0_9, %c0_10] : memref<1x2x256xf32, #tpu.memory_space<vmem>>, vector<1x1x256xf32>
    tpu.vector_store %arg3[%c0_8, %c0_9, %c0_10], %15 {strides = array<i32>} : memref<1x2x256xf32, #tpu.memory_space<vmem>>, vector<1x1x256xf32>,
    %17 = arith.extui %13 : vector<64x256xi1> to vector<64x256xi32>
    %cst_11 = arith.constant dense<0> : vector<256xi32>
    %18 = vector.multi_reduction <add>, %17, %cst_11 [0] : vector<64x256xi32> to vector<256xi32>
    %19 = arith.sitofp %18 : vector<256xi32> to vector<256xf32>
    %20 = vector.shape_cast %19 : vector<256xf32> to vector<1x1x256xf32>
    %c0_12 = arith.constant 0 : index
    %c1 = arith.constant 1 : index
    %c0_13 = arith.constant 0 : index
    %21 = vector.load %arg3[%c0_12, %c1, %c0_13] : memref<1x2x256xf32, #tpu.memory_space<vmem>>, vector<1x1x256xf32>
    tpu.vector_store %arg3[%c0_12, %c1, %c0_13], %20 {strides = array<i32>} : memref<1x2x256xf32, #tpu.memory_space<vmem>>, vector<1x1x256xf32>,
    %cst_14 = arith.constant dense<0.000000e+00> : vector<64xf32>
    %22 = vector.multi_reduction <add>, %7, %cst_14 [1] : vector<64x256xf32> to vector<64xf32>
    %23 = vector.shape_cast %22 : vector<64xf32> to vector<1x1x64xf32>
    %c0_15 = arith.constant 0 : index
    %c0_16 = arith.constant 0 : index
    %c0_17 = arith.constant 0 : index
    %24 = vector.load %arg4[%c0_15, %c0_16, %c0_17] : memref<1x1x64xf32, #tpu.memory_space<vmem>>, vector<1x1x64xf32>
    tpu.vector_store %arg4[%c0_15, %c0_16, %c0_17], %23 {strides = array<i32>} : memref<1x1x64xf32, #tpu.memory_space<vmem>>, vector<1x1x64xf32>,
    return
  }
  func.func @transform_0(%arg0: i32) -> (i32, i32) {
    %c0_i32 = arith.constant 0 : i32
    %c0_i32_0 = arith.constant 0 : i32
    return %arg0, %c0_i32 : i32, i32
  }
  func.func @transform_1(%arg0: i32) -> (i32, i32) {
    %c0_i32 = arith.constant 0 : i32
    %c0_i32_0 = arith.constant 0 : i32
    return %arg0, %c0_i32 : i32, i32
  }
  func.func @transform_2(%arg0: i32) -> (i32, i32, i32) {
    %c0_i32 = arith.constant 0 : i32
    %c0_i32_0 = arith.constant 0 : i32
    %c0_i32_1 = arith.constant 0 : i32
    return %arg0, %c0_i32, %c0_i32_0 : i32, i32, i32
  }
  func.func @transform_3(%arg0: i32) -> (i32, i32, i32) {
    %c0_i32 = arith.constant 0 : i32
    %c0_i32_0 = arith.constant 0 : i32
    %c0_i32_1 = arith.constant 0 : i32
    return %arg0, %c0_i32, %c0_i32_0 : i32, i32, i32
  }
}

</mosaic_0001>

<llo_original>
// kernel: tpu_custom_call.1
$region0: #{tpu_custom_call.1}
  #allocation0 [shape = 'u32[]', space=smem, size = 0x4, offset = 0x4, fixed_abs, tag = 'smem constant byte address 0x4 - core index']
  #allocation1 [shape = 'u32[144,128]{1,0:T(1,128)}', space=vmem, size = 0x12000, scoped, tag = 'internal scratch']
  %s0 = inlined_call_operand.hbm [shape: f32[256,256], index: 0, kind: input, shape index: {}]
  %s1 = inlined_call_operand.hbm [shape: f32[256,256], index: 1, kind: input, shape index: {}]
  %s2 = inlined_call_operand.hbm [shape: f32[4,2,256], index: 2, kind: output, shape index: {0}]
  %s3 = inlined_call_operand.hbm [shape: f32[4,1,64], index: 3, kind: output, shape index: {1}]
  %4 = xla_tuple %s2, %s3
  %s5 = sld [smem:[#allocation0]]
  $region57: #{tpu_custom_call.1} parent=0
    _
  %s7 = ssub.s32 1, %s5
  %s8 = scalar_select 0, %s7, %s5
  $region1: #{tpu_custom_call.1} parent=0
    #allocation2 [shape = 'u8[131072]{0}', space=vmem, size = 0x20000, scoped, tag = 'input window, operand 0']
    #allocation3 [shape = 's32[2]{0}', space=sflag, size = 0x8, scoped, tag = 'scoped memory for tpu_custom_call.1']
    #allocation4 [shape = 's32[2]{0}', space=sflag, size = 0x8, scoped, tag = 'scoped memory for tpu_custom_call.1']
    #allocation5 [shape = 'u8[131072]{0}', space=vmem, size = 0x20000, scoped, tag = 'input window, operand 1']
    #allocation6 [shape = 's32[2]{0}', space=sflag, size = 0x8, scoped, tag = 'scoped memory for tpu_custom_call.1']
    #allocation7 [shape = 'u8[4096]{0}', space=vmem, size = 0x1000, scoped, tag = 'output window, operand 0']
    #allocation8 [shape = 'u8[1024]{0}', space=vmem, size = 0x400, scoped, tag = 'output window, operand 1']
    #allocation9 [shape = 's32[2]{0}', space=sflag, size = 0x8, scoped, tag = 'scoped memory for tpu_custom_call.1']
    %9 = vsyncpa [#allocation3], 0
    %s10 = scalar_lea.sflag [#allocation3], 1
    %11 = vsyncpa %s10, 0
    %12 = vsyncpa [#allocation6], 0
    %s13 = scalar_lea.sflag [#allocation6], 1
    %14 = vsyncpa %s13, 0
    %15 = vsyncpa [#allocation4], 0
    %s16 = scalar_lea.sflag [#allocation4], 1
    %17 = vsyncpa %s16, 0
    %18 = vsyncpa [#allocation9], 0
    %s19 = scalar_lea.sflag [#allocation9], 1
    %20 = vsyncpa %s19, 0
    loop: start=0, step=1, limit=6
    $region2: #{tpu_custom_call.1} parent=1 // loop_pre_header
      _
    $region3: #{tpu_custom_call.1} parent=1 // loop_header
      %s22 = sphi 0, %s26
      %p23 = scmp.ge.s32.totalorder %s22, 6
      %s32 = sphi 0, %s34
      %s35 = sphi 0, %s32
      %s36 = sphi 0, %s35
      %s52 = sphi 0, %s36
      %s58 = sphi 0, %s60
      %s61 = sphi 0, %s58
      %s62 = sphi 0, %s61
      %s78 = sphi 0, %s62
      %s84 = sphi 0, %s86
      %s87 = sphi 0, %s84
      %s88 = sphi 0, %s87
      %s104 = sphi 0, %s88
      %s110 = sphi 0, %s112
      %s113 = sphi 0, %s110
      %s114 = sphi 0, %s113
      %s130 = sphi 0, %s114
    $region4: #{tpu_custom_call.1} parent=1 // loop_header_branch
      %25 = sbr.rel (%p23) target = $region8
    $region5: #{tpu_custom_call.1} parent=1 // loop_body
      %s27 = ssub.s32 %s22, 1
      %s28 = ssub.s32 %s22, 2
      %s29 = sadd.s32 %s22, 1
      %s30 = ssub.s32 %s22, %s29
      %p31 = scmp.eq.s32.totalorder %s30, 0
      %s33 = sadd.s32 %s32, 1
      %s34 = scalar_select %p31, %s32, %s33
      %p37 = pneg %p31
      %p38 = scmp.eq.s32.totalorder %s22, 3
      %p39 = por %p37, %p38
      %p40 = scmp.ne.s32.totalorder %s32, %s35
      %p41 = scmp.eq.s32.totalorder %s22, 0
      %p42 = por %p40, %p41
      %p43 = scmp.ne.s32.totalorder %s32, %s35
      %p44 = scmp.eq.s32.totalorder %s27, 3
      %p45 = por %p43, %p44
      %p46 = scmp.ne.s32.totalorder %s35, %s36
      %p47 = scmp.eq.s32.totalorder %s27, 0
      %p48 = por %p46, %p47
      %p49 = scmp.ne.s32.totalorder %s35, %s36
      %p50 = scmp.eq.s32.totalorder %s28, 3
      %p51 = por %p49, %p50
      %p53 = scmp.ne.s32.totalorder %s36, %s52
      %p54 = scmp.eq.s32.totalorder %s28, 0
      %p55 = por %p53, %p54
      %s56 = ssub.s32 %s22, %s29
      %p57 = scmp.eq.s32.totalorder %s56, 0
      %s59 = sadd.s32 %s58, 1
      %s60 = scalar_select %p57, %s58, %s59
      %p63 = pneg %p57
      %p64 = scmp.eq.s32.totalorder %s22, 3
      %p65 = por %p63, %p64
      %p66 = scmp.ne.s32.totalorder %s58, %s61
      %p67 = scmp.eq.s32.totalorder %s22, 0
      %p68 = por %p66, %p67
      %p69 = scmp.ne.s32.totalorder %s58, %s61
      %p70 = scmp.eq.s32.totalorder %s27, 3
      %p71 = por %p69, %p70
      %p72 = scmp.ne.s32.totalorder %s61, %s62
      %p73 = scmp.eq.s32.totalorder %s27, 0
      %p74 = por %p72, %p73
      %p75 = scmp.ne.s32.totalorder %s61, %s62
      %p76 = scmp.eq.s32.totalorder %s28, 3
      %p77 = por %p75, %p76
      %p79 = scmp.ne.s32.totalorder %s62, %s78
      %p80 = scmp.eq.s32.totalorder %s28, 0
      %p81 = por %p79, %p80
      %s82 = ssub.s32 %s22, %s29
      %p83 = scmp.eq.s32.totalorder %s82, 0
      %s85 = sadd.s32 %s84, 1
      %s86 = scalar_select %p83, %s84, %s85
      %p89 = pneg %p83
      %p90 = scmp.eq.s32.totalorder %s22, 3
      %p91 = por %p89, %p90
      %p92 = scmp.ne.s32.totalorder %s84, %s87
      %p93 = scmp.eq.s32.totalorder %s22, 0
      %p94 = por %p92, %p93
      %p95 = scmp.ne.s32.totalorder %s84, %s87
      %p96 = scmp.eq.s32.totalorder %s27, 3
      %p97 = por %p95, %p96
      %p98 = scmp.ne.s32.totalorder %s87, %s88
      %p99 = scmp.eq.s32.totalorder %s27, 0
      %p100 = por %p98, %p99
      %p101 = scmp.ne.s32.totalorder %s87, %s88
      %p102 = scmp.eq.s32.totalorder %s28, 3
      %p103 = por %p101, %p102
      %p105 = scmp.ne.s32.totalorder %s88, %s104
      %p106 = scmp.eq.s32.totalorder %s28, 0
      %p107 = por %p105, %p106
      %s108 = ssub.s32 %s22, %s29
      %p109 = scmp.eq.s32.totalorder %s108, 0
      %s111 = sadd.s32 %s110, 1
      %s112 = scalar_select %p109, %s110, %s111
      %p115 = pneg %p109
      %p116 = scmp.eq.s32.totalorder %s22, 3
      %p117 = por %p115, %p116
      %p118 = scmp.ne.s32.totalorder %s110, %s113
      %p119 = scmp.eq.s32.totalorder %s22, 0
      %p120 = por %p118, %p119
      %p121 = scmp.ne.s32.totalorder %s110, %s113
      %p122 = scmp.eq.s32.totalorder %s27, 3
      %p123 = por %p121, %p122
      %p124 = scmp.ne.s32.totalorder %s113, %s114
      %p125 = scmp.eq.s32.totalorder %s27, 0
      %p126 = por %p124, %p125
      %p127 = scmp.ne.s32.totalorder %s113, %s114
      %p128 = scmp.eq.s32.totalorder %s28, 3
      %p129 = por %p127, %p128
      %p131 = scmp.ne.s32.totalorder %s114, %s130
      %p132 = scmp.eq.s32.totalorder %s28, 0
      %p133 = por %p131, %p132
      %p134 = scmp.le.s32.totalorder 1, %s22
      %p135 = scmp.lt.s32.totalorder %s22, 5
      %p136 = pnand %p134, %p135
      %p137 = pneg %p136
      // Predicated region
      $region9: #{tpu_custom_call.1} parent=5 // pred_check
        _
      $region10: #{tpu_custom_call.1} parent=5 // pred_check_branch
        %139 = sbr.rel (%p136) target = $region12
      $region11: #{tpu_custom_call.1} parent=5 // pred_region
        %s140 = ssub.s32 %s22, 1
      $region12: #{tpu_custom_call.1} parent=5 // pred_fallthru
        _
      %p141 = scmp.lt.s32.totalorder %s22, 4
      // Predicated region
      $region13: #{tpu_custom_call.1} parent=5 // pred_check
        %p142 = pneg %p141
      $region14: #{tpu_custom_call.1} parent=5 // pred_check_branch
        %144 = sbr.rel (%p142) target = $region16
      $region15: #{tpu_custom_call.1} parent=5 // pred_region
        // Predicated region
        $region17: #{tpu_custom_call.1} parent=15 // pred_check
          %p145 = pneg %p42
        $region18: #{tpu_custom_call.1} parent=15 // pred_check_branch
          %147 = sbr.rel (%p145) target = $region20
        $region19: #{tpu_custom_call.1} parent=15 // pred_region
          %s148 = sand.u32 %s32, 1
          %s149 = scalar_lea.sflag [#allocation3], %s148
          %s150 = sand.u32 %s32, 1
          %s151 = smul.addr %s150, 128
          %s152 = scalar_lea.vmem [#allocation2], %s151
          %s153 = smul.u32 8, %s22
          %s155 = ssub.s32 2048, 2048
          %156 = vsyncadd %s149, %s155
          %s157 = smul.addr %s153, 2
          %s158 = smul.addr %s157, 128
          %s159 = scalar_lea.hbm %s0, %s158
          %s160 = sshll.u32 %s152, 4
          %s161 = int_to_ptr.vmem [resolvable:$true] %s160
          %166 = dma.hbm_to_vmem [thread:$0]  %s159, 2048, %s161, %s149, 256, 256, 16
        $region20: #{tpu_custom_call.1} parent=15 // pred_fallthru
          _
        // Predicated region
        $region21: #{tpu_custom_call.1} parent=15 // pred_check
          %p167 = pneg %p68
        $region22: #{tpu_custom_call.1} parent=15 // pred_check_branch
          %169 = sbr.rel (%p167) target = $region24
        $region23: #{tpu_custom_call.1} parent=15 // pred_region
          %s170 = sand.u32 %s58, 1
          %s171 = scalar_lea.sflag [#allocation6], %s170
          %s172 = sand.u32 %s58, 1
          %s173 = smul.addr %s172, 128
          %s174 = scalar_lea.vmem [#allocation5], %s173
          %s175 = smul.u32 8, %s22
          %s177 = ssub.s32 2048, 2048
          %178 = vsyncadd %s171, %s177
          %s179 = smul.addr %s175, 2
          %s180 = smul.addr %s179, 128
          %s181 = scalar_lea.hbm %s1, %s180
          %s182 = sshll.u32 %s174, 4
          %s183 = int_to_ptr.vmem [resolvable:$true] %s182
          %188 = dma.hbm_to_vmem [thread:$0]  %s181, 2048, %s183, %s171, 256, 256, 16
        $region24: #{tpu_custom_call.1} parent=15 // pred_fallthru
          _
      $region16: #{tpu_custom_call.1} parent=5 // pred_fallthru
        _
      %p189 = scmp.le.s32.totalorder 1, %s22
      %p190 = scmp.lt.s32.totalorder %s22, 5
      %p191 = pnand %p189, %p190
      %p192 = pneg %p191
      // Predicated region
      $region25: #{tpu_custom_call.1} parent=5 // pred_check
        _
      $region26: #{tpu_custom_call.1} parent=5 // pred_check_branch
        %194 = sbr.rel (%p191) target = $region28
      $region27: #{tpu_custom_call.1} parent=5 // pred_region
        %s195 = ssub.s32 %s22, 1
        %s196 = sand.u32 %s35, 1
        %s197 = scalar_lea.sflag [#allocation3], %s196
        %s198 = sand.u32 %s35, 1
        %s199 = smul.addr %s198, 128
        %s200 = scalar_lea.vmem [#allocation2], %s199
        // Predicated region
        $region29: #{tpu_custom_call.1} parent=27 // pred_check
          %p201 = pneg %p48
        $region30: #{tpu_custom_call.1} parent=27 // pred_check_branch
          %203 = sbr.rel (%p201) target = $region32
        $region31: #{tpu_custom_call.1} parent=27 // pred_region
          %204 = dma.done %s197, 2048
        $region32: #{tpu_custom_call.1} parent=27 // pred_fallthru
          _
        %s205 = sand.u32 %s61, 1
        %s206 = scalar_lea.sflag [#allocation6], %s205
        %s207 = sand.u32 %s61, 1
        %s208 = smul.addr %s207, 128
        %s209 = scalar_lea.vmem [#allocation5], %s208
        // Predicated region
        $region33: #{tpu_custom_call.1} parent=27 // pred_check
          %p210 = pneg %p74
        $region34: #{tpu_custom_call.1} parent=27 // pred_check_branch
          %212 = sbr.rel (%p210) target = $region36
        $region35: #{tpu_custom_call.1} parent=27 // pred_region
          %213 = dma.done %s206, 2048
        $region36: #{tpu_custom_call.1} parent=27 // pred_fallthru
          _
        %s214 = sand.u32 %s35, 1
        %s215 = scalar_lea.sflag [#allocation3], %s214
        %s216 = sand.u32 %s35, 1
        %s217 = smul.addr %s216, 128
        %s218 = scalar_lea.vmem [#allocation2], %s217
        %p219 = pneg %p48
        %p220 = pneg %p45
        %s221 = sand.u32 %s61, 1
        %s222 = scalar_lea.sflag [#allocation6], %s221
        %s223 = sand.u32 %s61, 1
        %s224 = smul.addr %s223, 128
        %s225 = scalar_lea.vmem [#allocation5], %s224
        %p226 = pneg %p74
        %p227 = pneg %p71
        %p228 = pneg %p100
        %p229 = pneg %p97
        %s230 = sand.u32 %s87, 1
        %s231 = scalar_lea.sflag [#allocation4], %s230
        %s232 = sand.u32 %s87, 1
        %s233 = smul.addr %s232, 4
        %s234 = scalar_lea.vmem [#allocation7], %s233
        %p235 = pneg %p126
        %p236 = pneg %p123
        %s237 = sand.u32 %s113, 1
        %s238 = scalar_lea.sflag [#allocation9], %s237
        %s239 = sand.u32 %s113, 1
        %s240 = scalar_lea.vmem [#allocation8], %s239
        %s241 = smul.u32 8, %s27
        %s242 = smul.u32 8, %s27
        %v243 = vld [vmem:[%s200] sm:$0xff]
        %v244 = vld [vmem:[%s200 + $0x8] sm:$0xff]
        %v245 = vld [vmem:[%s200 + $0x10] sm:$0xff]
        %v246 = vld [vmem:[%s200 + $0x18] sm:$0xff]
        %v247 = vld [vmem:[%s200 + $0x20] sm:$0xff]
        %v248 = vld [vmem:[%s200 + $0x28] sm:$0xff]
        %v249 = vld [vmem:[%s200 + $0x30] sm:$0xff]
        %v250 = vld [vmem:[%s200 + $0x38] sm:$0xff]
        %v251 = vld [vmem:[%s200 + $0x40] sm:$0xff]
        %v252 = vld [vmem:[%s200 + $0x48] sm:$0xff]
        %v253 = vld [vmem:[%s200 + $0x50] sm:$0xff]
        %v254 = vld [vmem:[%s200 + $0x58] sm:$0xff]
        %v255 = vld [vmem:[%s200 + $0x60] sm:$0xff]
        %v256 = vld [vmem:[%s200 + $0x68] sm:$0xff]
        %v257 = vld [vmem:[%s200 + $0x70] sm:$0xff]
        %v258 = vld [vmem:[%s200 + $0x78] sm:$0xff]
        %v259 = vld [vmem:[%s209] sm:$0xff]
        %v260 = vld [vmem:[%s209 + $0x8] sm:$0xff]
        %v261 = vld [vmem:[%s209 + $0x10] sm:$0xff]
        %v262 = vld [vmem:[%s209 + $0x18] sm:$0xff]
        %v263 = vld [vmem:[%s209 + $0x20] sm:$0xff]
        %v264 = vld [vmem:[%s209 + $0x28] sm:$0xff]
        %v265 = vld [vmem:[%s209 + $0x30] sm:$0xff]
        %v266 = vld [vmem:[%s209 + $0x38] sm:$0xff]
        %v267 = vld [vmem:[%s209 + $0x40] sm:$0xff]
        %v268 = vld [vmem:[%s209 + $0x48] sm:$0xff]
        %v269 = vld [vmem:[%s209 + $0x50] sm:$0xff]
        %v270 = vld [vmem:[%s209 + $0x58] sm:$0xff]
        %v271 = vld [vmem:[%s209 + $0x60] sm:$0xff]
        %v272 = vld [vmem:[%s209 + $0x68] sm:$0xff]
        %v273 = vld [vmem:[%s209 + $0x70] sm:$0xff]
        %v274 = vld [vmem:[%s209 + $0x78] sm:$0xff]
        %vm275 = vcmp.eq.f32.partialorder %v243, 0.0
        %vm276 = vcmp.eq.f32.partialorder %v244, 0.0
        %vm277 = vcmp.eq.f32.partialorder %v245, 0.0
        %vm278 = vcmp.eq.f32.partialorder %v246, 0.0
        %vm279 = vcmp.eq.f32.partialorder %v247, 0.0
        %vm280 = vcmp.eq.f32.partialorder %v248, 0.0
        %vm281 = vcmp.eq.f32.partialorder %v249, 0.0
        %vm282 = vcmp.eq.f32.partialorder %v250, 0.0
        %vm283 = vcmp.eq.f32.partialorder %v251, 0.0
        %vm284 = vcmp.eq.f32.partialorder %v252, 0.0
        %vm285 = vcmp.eq.f32.partialorder %v253, 0.0
        %vm286 = vcmp.eq.f32.partialorder %v254, 0.0
        %vm287 = vcmp.eq.f32.partialorder %v255, 0.0
        %vm288 = vcmp.eq.f32.partialorder %v256, 0.0
        %vm289 = vcmp.eq.f32.partialorder %v257, 0.0
        %vm290 = vcmp.eq.f32.partialorder %v258, 0.0
        %v291 = vsel %vm275, 0.0, %v259
        %v292 = vsel %vm276, 0.0, %v260
        %v293 = vsel %vm277, 0.0, %v261
        %v294 = vsel %vm278, 0.0, %v262
        %v295 = vsel %vm279, 0.0, %v263
        %v296 = vsel %vm280, 0.0, %v264
        %v297 = vsel %vm281, 0.0, %v265
        %v298 = vsel %vm282, 0.0, %v266
        %v299 = vsel %vm283, 0.0, %v267
        %v300 = vsel %vm284, 0.0, %v268
        %v301 = vsel %vm285, 0.0, %v269
        %v302 = vsel %vm286, 0.0, %v270
        %v303 = vsel %vm287, 0.0, %v271
        %v304 = vsel %vm288, 0.0, %v272
        %v305 = vsel %vm289, 0.0, %v273
        %v306 = vsel %vm290, 0.0, %v274
        %v307 = vsub.f32 %v291, %v243
        %v308 = vsub.f32 %v292, %v244
        %v309 = vsub.f32 %v293, %v245
        %v310 = vsub.f32 %v294, %v246
        %v311 = vsub.f32 %v295, %v247
        %v312 = vsub.f32 %v296, %v248
        %v313 = vsub.f32 %v297, %v249
        %v314 = vsub.f32 %v298, %v250
        %v315 = vsub.f32 %v299, %v251
        %v316 = vsub.f32 %v300, %v252
        %v317 = vsub.f32 %v301, %v253
        %v318 = vsub.f32 %v302, %v254
        %v319 = vsub.f32 %v303, %v255
        %v320 = vsub.f32 %v304, %v256
        %v321 = vsub.f32 %v305, %v257
        %v322 = vsub.f32 %v306, %v258
        %v323 = vmul.f32 %v307, %v307
        %v324 = vmul.f32 %v308, %v308
        %v325 = vmul.f32 %v309, %v309
        %v326 = vmul.f32 %v310, %v310
        %v327 = vmul.f32 %v311, %v311
        %v328 = vmul.f32 %v312, %v312
        %v329 = vmul.f32 %v313, %v313
        %v330 = vmul.f32 %v314, %v314
        %v331 = vmul.f32 %v315, %v315
        %v332 = vmul.f32 %v316, %v316
        %v333 = vmul.f32 %v317, %v317
        %v334 = vmul.f32 %v318, %v318
        %v335 = vmul.f32 %v319, %v319
        %v336 = vmul.f32 %v320, %v320
        %v337 = vmul.f32 %v321, %v321
        %v338 = vmul.f32 %v322, %v322
        %v339 = vmax.f32 %v243, 0.0003100996
        %v340 = vmax.f32 %v244, 0.0003100996
        %v341 = vmax.f32 %v245, 0.0003100996
        %v342 = vmax.f32 %v246, 0.0003100996
        %v343 = vmax.f32 %v247, 0.0003100996
        %v344 = vmax.f32 %v248, 0.0003100996
        %v345 = vmax.f32 %v249, 0.0003100996
        %v346 = vmax.f32 %v250, 0.0003100996
        %v347 = vmax.f32 %v251, 0.0003100996
        %v348 = vmax.f32 %v252, 0.0003100996
        %v349 = vmax.f32 %v253, 0.0003100996
        %v350 = vmax.f32 %v254, 0.0003100996
        %v351 = vmax.f32 %v255, 0.0003100996
        %v352 = vmax.f32 %v256, 0.0003100996
        %v353 = vmax.f32 %v257, 0.0003100996
        %v354 = vmax.f32 %v258, 0.0003100996
        %v355 = vmin.f32 %v339, 1.0
        %v356 = vmin.f32 %v340, 1.0
        %v357 = vmin.f32 %v341, 1.0
        %v358 = vmin.f32 %v342, 1.0
        %v359 = vmin.f32 %v343, 1.0
        %v360 = vmin.f32 %v344, 1.0
        %v361 = vmin.f32 %v345, 1.0
        %v362 = vmin.f32 %v346, 1.0
        %v363 = vmin.f32 %v347, 1.0
        %v364 = vmin.f32 %v348, 1.0
        %v365 = vmin.f32 %v349, 1.0
        %v366 = vmin.f32 %v350, 1.0
        %v367 = vmin.f32 %v351, 1.0
        %v368 = vmin.f32 %v352, 1.0
        %v369 = vmin.f32 %v353, 1.0
        %v370 = vmin.f32 %v354, 1.0
        %vm371 = vcmp.gt.f32.partialorder %v243, 0.0
        %vm372 = vcmp.gt.f32.partialorder %v244, 0.0
        %vm373 = vcmp.gt.f32.partialorder %v245, 0.0
        %vm374 = vcmp.gt.f32.partialorder %v246, 0.0
        %vm375 = vcmp.gt.f32.partialorder %v247, 0.0
        %vm376 = vcmp.gt.f32.partialorder %v248, 0.0
        %vm377 = vcmp.gt.f32.partialorder %v249, 0.0
        %vm378 = vcmp.gt.f32.partialorder %v250, 0.0
        %vm379 = vcmp.gt.f32.partialorder %v251, 0.0
        %vm380 = vcmp.gt.f32.partialorder %v252, 0.0
        %vm381 = vcmp.gt.f32.partialorder %v253, 0.0
        %vm382 = vcmp.gt.f32.partialorder %v254, 0.0
        %vm383 = vcmp.gt.f32.partialorder %v255, 0.0
        %vm384 = vcmp.gt.f32.partialorder %v256, 0.0
        %vm385 = vcmp.gt.f32.partialorder %v257, 0.0
        %vm386 = vcmp.gt.f32.partialorder %v258, 0.0
        %v387 = vadd.f32 %v355, %v357
        %v388 = vadd.f32 %v387, %v359
        %v389 = vadd.f32 %v388, %v361
        %v390 = vadd.f32 %v389, %v363
        %v391 = vadd.f32 %v390, %v365
        %v392 = vadd.f32 %v391, %v367
        %v393 = vadd.f32 %v392, %v369
        %v394 = vrot.slane %v393, 4
        %v395 = vadd.f32 %v393, %v394
        %v396 = vrot.slane %v395, 2
        %v397 = vadd.f32 %v395, %v396
        %v398 = vrot.slane %v397, 1
        %v399 = vadd.f32 %v397, %v398
        %v400 = vadd.f32 %v356, %v358
        %v401 = vadd.f32 %v400, %v360
        %v402 = vadd.f32 %v401, %v362
        %v403 = vadd.f32 %v402, %v364
        %v404 = vadd.f32 %v403, %v366
        %v405 = vadd.f32 %v404, %v368
        %v406 = vadd.f32 %v405, %v370
        %v407 = vrot.slane %v406, 4
        %v408 = vadd.f32 %v406, %v407
        %v409 = vrot.slane %v408, 2
        %v410 = vadd.f32 %v408, %v409
        %v411 = vrot.slane %v410, 1
        %v412 = vadd.f32 %v410, %v411
        %v415 = vcombine.low %v399, %v412
        %v417 = vunpack.c.l.s4 1966171168
        %v418 = vunpack.c.0.s8 %v417
        %v419 = vlaneseq
        %v420 = vshrl.u32 %v419, 7
        %v421 = vsub.s32 %v418, %v420
        %v422 = vrot.slane %v415, %v421
        %v424 = vunpack.c.l.s4 1966171168
        %v425 = vunpack.c.0.s8 %v424
        %v426 = vlaneseq
        %v427 = vshrl.u32 %v426, 7
        %v428 = vsub.s32 %v425, %v427
        %v429 = vrot.slane %v422, %v428
        %v431 = vlaneseq
        %vm432 = vcmp.ge.s32.totalorder %v431, 0
        %vm433 = vcmp.lt.s32.totalorder %v431, 256
        %vm434 = vmand %vm432, %vm433
        %435 = vst.msk [vmem:[%s234] ss:$2 sm:$0x3] %vm434, %v429
        %v436 = vsel %vm371, 1, 0
        %v437 = vsel %vm372, 1, 0
        %v438 = vsel %vm373, 1, 0
        %v439 = vsel %vm374, 1, 0
        %v440 = vsel %vm375, 1, 0
        %v441 = vsel %vm376, 1, 0
        %v442 = vsel %vm377, 1, 0
        %v443 = vsel %vm378, 1, 0
        %v444 = vsel %vm379, 1, 0
        %v445 = vsel %vm380, 1, 0
        %v446 = vsel %vm381, 1, 0
        %v447 = vsel %vm382, 1, 0
        %v448 = vsel %vm383, 1, 0
        %v449 = vsel %vm384, 1, 0
        %v450 = vsel %vm385, 1, 0
        %v451 = vsel %vm386, 1, 0
        %v452 = vadd.s32 %v436, %v440
        %v453 = vadd.s32 %v438, %v442
        %v454 = vadd.s32 %v452, %v444
        %v455 = vadd.s32 %v453, %v446
        %v456 = vadd.s32 %v454, %v448
        %v457 = vadd.s32 %v455, %v450
        %v458 = vadd.s32 %v456, %v457
        %v459 = vrot.slane %v458, 4
        %v460 = vadd.s32 %v458, %v459
        %v461 = vrot.slane %v460, 2
        %v462 = vadd.s32 %v460, %v461
        %v463 = vrot.slane %v462, 1
        %v464 = vadd.s32 %v462, %v463
        %v465 = vadd.s32 %v437, %v441
        %v466 = vadd.s32 %v439, %v443
        %v467 = vadd.s32 %v465, %v445
        %v468 = vadd.s32 %v466, %v447
        %v469 = vadd.s32 %v467, %v449
        %v470 = vadd.s32 %v468, %v451
        %v471 = vadd.s32 %v469, %v470
        %v472 = vrot.slane %v471, 4
        %v473 = vadd.s32 %v471, %v472
        %v474 = vrot.slane %v473, 2
        %v475 = vadd.s32 %v473, %v474
        %v476 = vrot.slane %v475, 1
        %v477 = vadd.s32 %v475, %v476
        %v478 = vcvt.s32.f32 %v464
        %v479 = vcvt.s32.f32 %v477
        %v482 = vcombine.low %v478, %v479
        %v484 = vunpack.c.l.s4 1966171168
        %v485 = vunpack.c.0.s8 %v484
        %v486 = vlaneseq
        %v487 = vshrl.u32 %v486, 7
        %v488 = vsub.s32 %v485, %v487
        %v489 = vrot.slane %v482, %v488
        %v491 = vunpack.c.l.s4 1966171168
        %v492 = vunpack.c.0.s8 %v491
        %v493 = vlaneseq
        %v494 = vshrl.u32 %v493, 7
        %v495 = vsub.s32 %v492, %v494
        %v496 = vrot.slane %v489, %v495
        %s498 = scalar_lea.vmem %s234, 1 [#allocation7]
        %499 = vst.msk [vmem:[%s498] ss:$2 sm:$0x3] %vm434, %v496
        %v500 = vadd.f32 %v323, %v324
        %501 = vadd.xlane.f32.xlu0 %v500
        %v502 = vpop.xlane.xlu0 %501
        %v503 = vadd.f32 %v325, %v326
        %504 = vadd.xlane.f32.xlu0 %v503
        %v505 = vpop.xlane.xlu0 %504
        %v506 = vadd.f32 %v327, %v328
        %507 = vadd.xlane.f32.xlu0 %v506
        %v508 = vpop.xlane.xlu0 %507
        %v509 = vadd.f32 %v329, %v330
        %510 = vadd.xlane.f32.xlu0 %v509
        %v511 = vpop.xlane.xlu0 %510
        %v512 = vadd.f32 %v331, %v332
        %513 = vadd.xlane.f32.xlu0 %v512
        %v514 = vpop.xlane.xlu0 %513
        %v515 = vadd.f32 %v333, %v334
        %516 = vadd.xlane.f32.xlu0 %v515
        %v517 = vpop.xlane.xlu0 %516
        %v518 = vadd.f32 %v335, %v336
        %519 = vadd.xlane.f32.xlu0 %v518
        %v520 = vpop.xlane.xlu0 %519
        %v521 = vadd.f32 %v337, %v338
        %522 = vadd.xlane.f32.xlu0 %v521
        %v523 = vpop.xlane.xlu0 %522
        %v532 = vlaneseq
        %v533 = vand.u32 %v532, 127
        %v534 = vlaneseq
        %v535 = vshrl.u32 %v534, 7
        %v536 = vsub.s32 %v533, %v535
        %v537 = vrot.slane %v502, %v536
        %v538 = vadd.s32 %v533, 4294967288
        %v539 = vlaneseq
        %v540 = vshrl.u32 %v539, 7
        %v541 = vsub.s32 %v538, %v540
        %v542 = vrot.slane %v505, %v541
        %vm543 = vcmask 130112
        %v544 = vsel %vm543, %v542, %v537
        %v545 = vadd.s32 %v533, 4294967280
        %v546 = vlaneseq
        %v547 = vshrl.u32 %v546, 7
        %v548 = vsub.s32 %v545, %v547
        %v549 = vrot.slane %v508, %v548
        %vm550 = vcmask 195712
        %v551 = vsel %vm550, %v549, %v544
        %v552 = vadd.s32 %v533, 4294967272
        %v553 = vlaneseq
        %v554 = vshrl.u32 %v553, 7
        %v555 = vsub.s32 %v552, %v554
        %v556 = vrot.slane %v511, %v555
        %vm557 = vcmask 261312
        %v558 = vsel %vm557, %v556, %v551
        %v559 = vadd.s32 %v533, 4294967264
        %v560 = vlaneseq
        %v561 = vshrl.u32 %v560, 7
        %v562 = vsub.s32 %v559, %v561
        %v563 = vrot.slane %v514, %v562
        %vm564 = vcmask 326912
        %v565 = vsel %vm564, %v563, %v558
        %v566 = vadd.s32 %v533, 4294967256
        %v567 = vlaneseq
        %v568 = vshrl.u32 %v567, 7
        %v569 = vsub.s32 %v566, %v568
        %v570 = vrot.slane %v517, %v569
        %vm571 = vcmask 392512
        %v572 = vsel %vm571, %v570, %v565
        %v573 = vadd.s32 %v533, 4294967248
        %v574 = vlaneseq
        %v575 = vshrl.u32 %v574, 7
        %v576 = vsub.s32 %v573, %v575
        %v577 = vrot.slane %v520, %v576
        %vm578 = vcmask 458112
        %v579 = vsel %vm578, %v577, %v572
        %v580 = vadd.s32 %v533, 4294967240
        %v581 = vlaneseq
        %v582 = vshrl.u32 %v581, 7
        %v583 = vsub.s32 %v580, %v582
        %v584 = vrot.slane %v523, %v583
        %vm585 = vcmask 523712
        %v586 = vsel %vm585, %v584, %v579
        %vm588 = vcmask 516096
        %589 = vst.msk [vmem:[%s240] sm:$0x1] %vm588, %v586
        %s590 = sand.u32 %s87, 1
        %s591 = scalar_lea.sflag [#allocation4], %s590
        %s592 = sand.u32 %s87, 1
        %s593 = smul.addr %s592, 4
        %s594 = scalar_lea.vmem [#allocation7], %s593
        %s595 = sand.u32 %s113, 1
        %s596 = scalar_lea.sflag [#allocation9], %s595
        %s597 = sand.u32 %s113, 1
        %s598 = scalar_lea.vmem [#allocation8], %s597
        // Predicated region
        $region37: #{tpu_custom_call.1} parent=27 // pred_check
          %p599 = pneg %p97
        $region38: #{tpu_custom_call.1} parent=27 // pred_check_branch
          %601 = sbr.rel (%p599) target = $region40
        $region39: #{tpu_custom_call.1} parent=27 // pred_region
          %s603 = ssub.s32 64, 64
          %604 = vsyncadd %s591, %s603
          %s605 = smul.addr %s27, 2
          %s606 = smul.addr %s605, 32
          %s607 = scalar_lea.hbm %s2, %s606
          %s609 = sshll.u32 %s594, 4
          %s610 = int_to_ptr.vmem [resolvable:$true] %s609
          %612 = dma.vmem_to_hbm [thread:$0]  %s610, 64, %s607, %s591
        $region40: #{tpu_custom_call.1} parent=27 // pred_fallthru
          _
        // Predicated region
        $region41: #{tpu_custom_call.1} parent=27 // pred_check
          %p613 = pneg %p123
        $region42: #{tpu_custom_call.1} parent=27 // pred_check_branch
          %615 = sbr.rel (%p613) target = $region44
        $region43: #{tpu_custom_call.1} parent=27 // pred_region
          %s617 = ssub.s32 16, 16
          %618 = vsyncadd %s596, %s617
          %s619 = smul.addr %s27, 16
          %s620 = scalar_lea.hbm %s3, %s619
          %s622 = sshll.u32 %s598, 4
          %s623 = int_to_ptr.vmem [resolvable:$true] %s622
          %625 = dma.vmem_to_hbm [thread:$0]  %s623, 16, %s620, %s596
        $region44: #{tpu_custom_call.1} parent=27 // pred_fallthru
          _
      $region28: #{tpu_custom_call.1} parent=5 // pred_fallthru
        _
      %p626 = scmp.le.s32.totalorder 2, %s22
      // Predicated region
      $region45: #{tpu_custom_call.1} parent=5 // pred_check
        %p627 = pneg %p626
      $region46: #{tpu_custom_call.1} parent=5 // pred_check_branch
        %629 = sbr.rel (%p627) target = $region48
      $region47: #{tpu_custom_call.1} parent=5 // pred_region
        %s630 = ssub.s32 %s22, 2
        // Predicated region
        $region49: #{tpu_custom_call.1} parent=47 // pred_check
          %p631 = pneg %p103
        $region50: #{tpu_custom_call.1} parent=47 // pred_check_branch
          %633 = sbr.rel (%p631) target = $region52
        $region51: #{tpu_custom_call.1} parent=47 // pred_region
          %s634 = sand.u32 %s88, 1
          %s635 = scalar_lea.sflag [#allocation4], %s634
          %s636 = sand.u32 %s88, 1
          %s637 = smul.addr %s636, 4
          %s638 = scalar_lea.vmem [#allocation7], %s637
          %639 = dma.done %s635, 64
        $region52: #{tpu_custom_call.1} parent=47 // pred_fallthru
          _
        // Predicated region
        $region53: #{tpu_custom_call.1} parent=47 // pred_check
          %p640 = pneg %p129
        $region54: #{tpu_custom_call.1} parent=47 // pred_check_branch
          %642 = sbr.rel (%p640) target = $region56
        $region55: #{tpu_custom_call.1} parent=47 // pred_region
          %s643 = sand.u32 %s114, 1
          %s644 = scalar_lea.sflag [#allocation9], %s643
          %s645 = sand.u32 %s114, 1
          %s646 = scalar_lea.vmem [#allocation8], %s645
          %647 = dma.done %s644, 16
        $region56: #{tpu_custom_call.1} parent=47 // pred_fallthru
          _
      $region48: #{tpu_custom_call.1} parent=5 // pred_fallthru
        _
    $region6: #{tpu_custom_call.1} parent=1 // loop_footer
      %s26 = sadd.s32 1, %s22
    $region7: #{tpu_custom_call.1} parent=1 // loop_footer_branch
      %21 = sbr.rel target = $region3
    $region8: #{tpu_custom_call.1} parent=1 // loop_exit
      _
    %648 = vsyncpa [#allocation3], 1
    %s649 = scalar_lea.sflag [#allocation3], 1
    %650 = vsyncpa %s649, 1
    %651 = vsyncpa [#allocation6], 1
    %s652 = scalar_lea.sflag [#allocation6], 1
    %653 = vsyncpa %s652, 1
    %654 = vsyncpa [#allocation4], 1
    %s655 = scalar_lea.sflag [#allocation4], 1
    %656 = vsyncpa %s655, 1
    %657 = vsyncpa [#allocation9], 1
    %s658 = scalar_lea.sflag [#allocation9], 1
    %659 = vsyncpa %s658, 1

</llo_original>
